<compile_context>
chip_gen: v7x
topology: tpu7x:2x2x1
jax: 0.10.0
libtpu: 0.0.40
codegen_flags: <defaults>
</compile_context>

<pallas_src>
import functools

import jax
import jax.numpy as jnp
from jax.experimental import pallas as pl
from jax.experimental.pallas import tpu as pltpu


def _round_up(a, b):
    return ((a + b - 1) // b) * b


def _mlp_act_set_kernel(margin, n1, n2, *refs):
    """One (TILE_N, S, 2) block of examples, fully resident in VMEM.

    refs = (x_ref,
            W1_0, b1_0, ..., W1_{n1-1}, b1_{n1-1},   # encoder1, W:(in,out) b:(1,out)
            W2_0, b2_0, ..., W2_{n2-1}, b2_{n2-1},   # encoder2
            o_ref)
    """
    x_ref = refs[0]
    enc1 = refs[1:1 + 2 * n1]
    enc2 = refs[1 + 2 * n1:1 + 2 * n1 + 2 * n2]
    o_ref = refs[-1]

    tn, S, _ = x_ref.shape
    inv_s = 1.0 / float(S)
    x = x_ref[...].astype(jnp.float32)                  # (TILE_N, S, 2)

    if n1 == 1:
        # Single affine encoder1 layer: the mean commutes with it -> pool first.
        px = jnp.sum(x, axis=1) * inv_s                  # (TILE_N, 2)
        w = enc1[0][...]                                 # (2, nh)
        b = enc1[1][...]                                 # (1, nh)
        h = px[:, 0:1] * w[0:1, :] + px[:, 1:2] * w[1:2, :] + b
    else:
        # Layer 0 has K=2: keep it off the MXU -- two broadcast FMAs on the VPU.
        w0 = enc1[0][...]                                # (2, nh)
        b0 = enc1[1][...]                                # (1, nh)
        h = (x[..., 0:1] * w0[0:1, :].reshape(1, 1, -1)
             + x[..., 1:2] * w0[1:2, :].reshape(1, 1, -1)
             + b0.reshape(1, 1, -1))                     # (TILE_N, S, nh)
        h = jnp.maximum(h, 0.0)

        # Middle point-wise layers (only exist when nlayers1 >= 3): run them as
        # 2-D MXU matmuls on the flattened (TILE_N*S, d) slab.
        if n1 > 2:
            h = h.reshape(tn * S, h.shape[-1])
            for i in range(1, n1 - 1):
                w = enc1[2 * i][...]
                b = enc1[2 * i + 1][...]
                h = jnp.dot(h, w, preferred_element_type=jnp.float32) + b
                h = jnp.maximum(h, 0.0)
            h = h.reshape(tn, S, h.shape[-1])

        # Mean over the set (sublane reduction).  The last encoder1 layer is
        # affine with no activation, so pooling is hoisted in front of it:
        # only TILE_N rows (not TILE_N*S) go through that matmul.
        h = jnp.sum(h, axis=1) * inv_s                   # (TILE_N, nh_prev)
        w = enc1[2 * (n1 - 1)][...]
        b = enc1[2 * (n1 - 1) + 1][...]
        h = jnp.dot(h, w, preferred_element_type=jnp.float32) + b

    # encoder2: (TILE_N, nh) -> (TILE_N, 2)
    for i in range(n2):
        w = enc2[2 * i][...]
        b = enc2[2 * i + 1][...]
        h = jnp.dot(h, w, preferred_element_type=jnp.float32) + b
        if i < n2 - 1:
            h = jnp.maximum(h, 0.0)

    o_ref[...] = (margin * jnp.tanh(h)).astype(o_ref.dtype)


def _linear_params(key, fan_in, fan_out):
    """Deterministic PyTorch-nn.Linear-style init: U(-1/sqrt(fan_in), 1/sqrt(fan_in))."""
    kw, kb = jax.random.split(key)
    bound = 1.0 / (fan_in ** 0.5)
    w = jax.random.uniform(kw, (fan_in, fan_out), jnp.float32, -bound, bound)
    b = jax.random.uniform(kb, (1, fan_out), jnp.float32, -bound, bound)
    return w, b


def init_params(key, ninput, nh, nh2, nlayers, nlayers2):
    """Builds encoder1 (ninput->nh...->nh) and encoder2 (nh->nh2...->2) weights."""
    def mlp_dims(nin, nhid, nout, nlay):
        if nlay == 1:
            return [(nin, nout)]
        return [(nin, nhid)] + [(nhid, nhid)] * (nlay - 2) + [(nhid, nout)]

    dims1 = mlp_dims(ninput, nh, nh, nlayers)
    dims2 = mlp_dims(nh, nh2, 2, nlayers2)
    keys = jax.random.split(key, len(dims1) + len(dims2))

    enc1, enc2 = [], []
    for i, (fi, fo) in enumerate(dims1):
        enc1.extend(_linear_params(keys[i], fi, fo))
    for j, (fi, fo) in enumerate(dims2):
        enc2.extend(_linear_params(keys[len(dims1) + j], fi, fo))
    return enc1, enc2


def mlp_act_set_forward(fvs, enc1_params, enc2_params, margin, *, tile_n=256):
    """JAX wrapper: free reshape to (N, S, 2), pad N to the tile, one gridded pallas_call."""
    N = fvs.shape[0]
    x3 = fvs.reshape(N, -1, 2)                     # (N, S, 2), metadata-only reshape
    S = x3.shape[1]

    n1 = len(enc1_params) // 2
    n2 = len(enc2_params) // 2

    tile_n = max(8, min(_round_up(tile_n, 8), _round_up(N, 8)))
    n_pad = _round_up(N, tile_n)
    if n_pad != N:
        x3 = jnp.pad(x3, ((0, n_pad - N), (0, 0), (0, 0)))

    grid = (n_pad // tile_n,)

    in_specs = [pl.BlockSpec((tile_n, S, 2), lambda i: (i, 0, 0))]
    params = list(enc1_params) + list(enc2_params)
    for p in params:
        # Full-array block, constant index_map -> weights stay VMEM-resident.
        in_specs.append(pl.BlockSpec(p.shape, lambda i, nd=p.ndim: (0,) * nd))

    kernel = functools.partial(_mlp_act_set_kernel, float(margin), n1, n2)

    out = pl.pallas_call(
        kernel,
        out_shape=jax.ShapeDtypeStruct((n_pad, 2), jnp.float32),
        grid=grid,
        in_specs=in_specs,
        out_specs=pl.BlockSpec((tile_n, 2), lambda i: (i, 0)),
        compiler_params=pltpu.CompilerParams(
            dimension_semantics=("parallel",)),
    )(x3, *params)
    return out[:N]


def _reference_forward(fvs, enc1_params, enc2_params, margin):
    """Pure-JAX reference for correctness checking (no mean-hoisting)."""
    N = fvs.shape[0]
    h = fvs.reshape(N, -1, 2).astype(jnp.float32)
    n1 = len(enc1_params) // 2
    n2 = len(enc2_params) // 2
    for i in range(n1):
        h = h @ enc1_params[2 * i] + enc1_params[2 * i + 1]
        if i < n1 - 1:
            h = jnp.maximum(h, 0.0)
    h = h.mean(axis=-2)
    for i in range(n2):
        h = h @ enc2_params[2 * i] + enc2_params[2 * i + 1]
        if i < n2 - 1:
            h = jnp.maximum(h, 0.0)
    return margin * jnp.tanh(h)


if __name__ == "__main__":
    # Hyperparameters (params.nh, params.nh2, params.nlayers, params.nlayers2, params.margin)
    NH, NH2 = 32, 32
    NLAYERS, NLAYERS2 = 2, 2
    MARGIN = 2.0

    key = jax.random.PRNGKey(0)
    k_data, k_param, k_data2 = jax.random.split(key, 3)
    enc1_params, enc2_params = init_params(k_param, 2, NH, NH2, NLAYERS, NLAYERS2)

    # Small problem: N=2 examples, each a set of S=8 2-d points -> fvs is (2, 16).
    N, S = 2, 8
    fvs = jax.random.normal(k_data, (N, S * 2), dtype=jnp.float32)

    out = mlp_act_set_forward(fvs, enc1_params, enc2_params, MARGIN)
    out = jax.block_until_ready(out)
    ref = _reference_forward(fvs, enc1_params, enc2_params, MARGIN)
    assert out.shape == (N, 2)
    assert jnp.allclose(out, ref, atol=2e-5, rtol=2e-5), (out, ref)

    # Second check: exercises the grid (multiple tiles) and the N-padding path.
    N2 = 520
    fvs2 = jax.random.normal(k_data2, (N2, S * 2), dtype=jnp.float32)
    out2 = mlp_act_set_forward(fvs2, enc1_params, enc2_params, MARGIN)
    out2 = jax.block_until_ready(out2)
    ref2 = _reference_forward(fvs2, enc1_params, enc2_params, MARGIN)
    assert out2.shape == (N2, 2)
    assert jnp.allclose(out2, ref2, atol=2e-5, rtol=2e-5)

    print("KERNEL_OK")
</pallas_src>

<mosaic_0001>
module attributes {stable_mosaic.version = 11 : i64} {
  func.func @_mlp_act_set_kernel(%arg0: i32, %arg1: memref<8x8x2xf32, #tpu.memory_space<vmem>>, %arg2: memref<2x32xf32, #tpu.memory_space<vmem>>, %arg3: memref<1x32xf32, #tpu.memory_space<vmem>>, %arg4: memref<32x32xf32, #tpu.memory_space<vmem>>, %arg5: memref<1x32xf32, #tpu.memory_space<vmem>>, %arg6: memref<32x32xf32, #tpu.memory_space<vmem>>, %arg7: memref<1x32xf32, #tpu.memory_space<vmem>>, %arg8: memref<32x2xf32, #tpu.memory_space<vmem>>, %arg9: memref<1x2xf32, #tpu.memory_space<vmem>>, %arg10: memref<8x2xf32, #tpu.memory_space<vmem>>) attributes {dimension_semantics = [#tpu.dimension_semantics<parallel>], iteration_bounds = array<i64: 1>, scalar_prefetch = 0 : i64, scratch_operands = 0 : i64, tpu.core_type = #tpu.core_type<tc>, window_params = [{transform_indices = @transform_0, window_bounds = array<i64: 8, 8, 2>}, {pipeline_mode = #tpu.pipeline_mode<synchronous>, transform_indices = @transform_1, window_bounds = array<i64: 2, 32>}, {pipeline_mode = #tpu.pipeline_mode<synchronous>, transform_indices = @transform_2, window_bounds = array<i64: 1, 32>}, {pipeline_mode = #tpu.pipeline_mode<synchronous>, transform_indices = @transform_3, window_bounds = array<i64: 32, 32>}, {pipeline_mode = #tpu.pipeline_mode<synchronous>, transform_indices = @transform_4, window_bounds = array<i64: 1, 32>}, {pipeline_mode = #tpu.pipeline_mode<synchronous>, transform_indices = @transform_5, window_bounds = array<i64: 32, 32>}, {pipeline_mode = #tpu.pipeline_mode<synchronous>, transform_indices = @transform_6, window_bounds = array<i64: 1, 32>}, {pipeline_mode = #tpu.pipeline_mode<synchronous>, transform_indices = @transform_7, window_bounds = array<i64: 32, 2>}, {pipeline_mode = #tpu.pipeline_mode<synchronous>, transform_indices = @transform_8, window_bounds = array<i64: 1, 2>}, {transform_indices = @transform_9, window_bounds = array<i64: 8, 2>}]} {
    %c0 = arith.constant 0 : index
    %c0_0 = arith.constant 0 : index
    %c0_1 = arith.constant 0 : index
    %0 = vector.load %arg1[%c0, %c0_0, %c0_1] : memref<8x8x2xf32, #tpu.memory_space<vmem>>, vector<8x8x2xf32>
    %c0_2 = arith.constant 0 : index
    %c0_3 = arith.constant 0 : index
    %1 = vector.load %arg2[%c0_2, %c0_3] : memref<2x32xf32, #tpu.memory_space<vmem>>, vector<2x32xf32>
    %c0_4 = arith.constant 0 : index
    %c0_5 = arith.constant 0 : index
    %2 = vector.load %arg3[%c0_4, %c0_5] : memref<1x32xf32, #tpu.memory_space<vmem>>, vector<1x32xf32>
    %3 = vector.extract_strided_slice %0 {offsets = [0, 0, 0], sizes = [8, 8, 1], strides = [1, 1, 1]} : vector<8x8x2xf32> to vector<8x8x1xf32>
    %4 = vector.extract_strided_slice %1 {offsets = [0, 0], sizes = [1, 32], strides = [1, 1]} : vector<2x32xf32> to vector<1x32xf32>
    %5 = vector.shape_cast %4 : vector<1x32xf32> to vector<1x1x32xf32>
    %6 = vector.broadcast %3 : vector<8x8x1xf32> to vector<8x8x32xf32>
    %7 = vector.broadcast %5 : vector<1x1x32xf32> to vector<8x8x32xf32>
    %8 = arith.mulf %6, %7 : vector<8x8x32xf32>
    %9 = vector.extract_strided_slice %0 {offsets = [0, 0, 1], sizes = [8, 8, 1], strides = [1, 1, 1]} : vector<8x8x2xf32> to vector<8x8x1xf32>
    %10 = vector.extract_strided_slice %1 {offsets = [1, 0], sizes = [1, 32], strides = [1, 1]} : vector<2x32xf32> to vector<1x32xf32>
    %11 = vector.shape_cast %10 : vector<1x32xf32> to vector<1x1x32xf32>
    %12 = vector.broadcast %9 : vector<8x8x1xf32> to vector<8x8x32xf32>
    %13 = vector.broadcast %11 : vector<1x1x32xf32> to vector<8x8x32xf32>
    %14 = arith.mulf %12, %13 : vector<8x8x32xf32>
    %15 = arith.addf %8, %14 : vector<8x8x32xf32>
    %16 = vector.shape_cast %2 : vector<1x32xf32> to vector<1x1x32xf32>
    %17 = vector.broadcast %16 : vector<1x1x32xf32> to vector<8x8x32xf32>
    %18 = arith.addf %15, %17 : vector<8x8x32xf32>
    %cst = arith.constant 0.000000e+00 : f32
    %19 = vector.broadcast %cst : f32 to vector<8x8x32xf32>
    %20 = arith.maximumf %18, %19 : vector<8x8x32xf32>
    %cst_6 = arith.constant dense<0.000000e+00> : vector<8x32xf32>
    %21 = vector.multi_reduction <add>, %20, %cst_6 [1] : vector<8x8x32xf32> to vector<8x32xf32>
    %cst_7 = arith.constant 1.250000e-01 : f32
    %22 = vector.broadcast %cst_7 : f32 to vector<8x32xf32>
    %23 = arith.mulf %21, %22 : vector<8x32xf32>
    %c0_8 = arith.constant 0 : index
    %c0_9 = arith.constant 0 : index
    %24 = vector.load %arg4[%c0_8, %c0_9] : memref<32x32xf32, #tpu.memory_space<vmem>>, vector<32x32xf32>
    %c0_10 = arith.constant 0 : index
    %c0_11 = arith.constant 0 : index
    %25 = vector.load %arg5[%c0_10, %c0_11] : memref<1x32xf32, #tpu.memory_space<vmem>>, vector<1x32xf32>
    %cst_12 = arith.constant dense<0.000000e+00> : vector<8x32xf32>
    %26 = tpu.matmul %23, %24, %cst_12 {dimension_numbers = #tpu.dot_dimension_numbers<[1], [0], [0], [1], [0, 0, 1, 1], [], []>} : vector<8x32xf32>, vector<32x32xf32>, vector<8x32xf32> -> vector<8x32xf32>
    %27 = vector.broadcast %25 : vector<1x32xf32> to vector<8x32xf32>
    %28 = arith.addf %26, %27 : vector<8x32xf32>
    %c0_13 = arith.constant 0 : index
    %c0_14 = arith.constant 0 : index
    %29 = vector.load %arg6[%c0_13, %c0_14] : memref<32x32xf32, #tpu.memory_space<vmem>>, vector<32x32xf32>
    %c0_15 = arith.constant 0 : index
    %c0_16 = arith.constant 0 : index
    %30 = vector.load %arg7[%c0_15, %c0_16] : memref<1x32xf32, #tpu.memory_space<vmem>>, vector<1x32xf32>
    %cst_17 = arith.constant dense<0.000000e+00> : vector<8x32xf32>
    %31 = tpu.matmul %28, %29, %cst_17 {dimension_numbers = #tpu.dot_dimension_numbers<[1], [0], [0], [1], [0, 0, 1, 1], [], []>} : vector<8x32xf32>, vector<32x32xf32>, vector<8x32xf32> -> vector<8x32xf32>
    %32 = vector.broadcast %30 : vector<1x32xf32> to vector<8x32xf32>
    %33 = arith.addf %31, %32 : vector<8x32xf32>
    %cst_18 = arith.constant 0.000000e+00 : f32
    %34 = vector.broadcast %cst_18 : f32 to vector<8x32xf32>
    %35 = arith.maximumf %33, %34 : vector<8x32xf32>
    %c0_19 = arith.constant 0 : index
    %c0_20 = arith.constant 0 : index
    %36 = vector.load %arg8[%c0_19, %c0_20] : memref<32x2xf32, #tpu.memory_space<vmem>>, vector<32x2xf32>
    %c0_21 = arith.constant 0 : index
    %c0_22 = arith.constant 0 : index
    %37 = vector.load %arg9[%c0_21, %c0_22] : memref<1x2xf32, #tpu.memory_space<vmem>>, vector<1x2xf32>
    %cst_23 = arith.constant dense<0.000000e+00> : vector<8x2xf32>
    %38 = tpu.matmul %35, %36, %cst_23 {dimension_numbers = #tpu.dot_dimension_numbers<[1], [0], [0], [1], [0, 0, 1, 1], [], []>} : vector<8x32xf32>, vector<32x2xf32>, vector<8x2xf32> -> vector<8x2xf32>
    %39 = vector.broadcast %37 : vector<1x2xf32> to vector<8x2xf32>
    %40 = arith.addf %38, %39 : vector<8x2xf32>
    %41 = math.tanh %40 : vector<8x2xf32>
    %cst_24 = arith.constant 2.000000e+00 : f32
    %42 = vector.broadcast %cst_24 : f32 to vector<8x2xf32>
    %43 = arith.mulf %42, %41 : vector<8x2xf32>
    %c0_25 = arith.constant 0 : index
    %c0_26 = arith.constant 0 : index
    %44 = vector.load %arg10[%c0_25, %c0_26] : memref<8x2xf32, #tpu.memory_space<vmem>>, vector<8x2xf32>
    tpu.vector_store %arg10[%c0_25, %c0_26], %43 {strides = array<i32>} : memref<8x2xf32, #tpu.memory_space<vmem>>, vector<8x2xf32>,
    return
  }
  func.func @transform_0(%arg0: i32) -> (i32, i32, i32) {
    %c0_i32 = arith.constant 0 : i32
    %c0_i32_0 = arith.constant 0 : i32
    %c0_i32_1 = arith.constant 0 : i32
    return %arg0, %c0_i32, %c0_i32_0 : i32, i32, i32
  }
  func.func @transform_1(%arg0: i32) -> (i32, i32) {
    %c0_i32 = arith.constant 0 : i32
    %c0_i32_0 = arith.constant 0 : i32
    %c0_i32_1 = arith.constant 0 : i32
    return %c0_i32, %c0_i32_0 : i32, i32
  }
  func.func @transform_2(%arg0: i32) -> (i32, i32) {
    %c0_i32 = arith.constant 0 : i32
    %c0_i32_0 = arith.constant 0 : i32
    %c0_i32_1 = arith.constant 0 : i32
    return %c0_i32, %c0_i32_0 : i32, i32
  }
  func.func @transform_3(%arg0: i32) -> (i32, i32) {
    %c0_i32 = arith.constant 0 : i32
    %c0_i32_0 = arith.constant 0 : i32
    %c0_i32_1 = arith.constant 0 : i32
    return %c0_i32, %c0_i32_0 : i32, i32
  }
  func.func @transform_4(%arg0: i32) -> (i32, i32) {
    %c0_i32 = arith.constant 0 : i32
    %c0_i32_0 = arith.constant 0 : i32
    %c0_i32_1 = arith.constant 0 : i32
    return %c0_i32, %c0_i32_0 : i32, i32
  }
  func.func @transform_5(%arg0: i32) -> (i32, i32) {
    %c0_i32 = arith.constant 0 : i32
    %c0_i32_0 = arith.constant 0 : i32
    %c0_i32_1 = arith.constant 0 : i32
    return %c0_i32, %c0_i32_0 : i32, i32
  }
  func.func @transform_6(%arg0: i32) -> (i32, i32) {
    %c0_i32 = arith.constant 0 : i32
    %c0_i32_0 = arith.constant 0 : i32
    %c0_i32_1 = arith.constant 0 : i32
    return %c0_i32, %c0_i32_0 : i32, i32
  }
  func.func @transform_7(%arg0: i32) -> (i32, i32) {
    %c0_i32 = arith.constant 0 : i32
    %c0_i32_0 = arith.constant 0 : i32
    %c0_i32_1 = arith.constant 0 : i32
    return %c0_i32, %c0_i32_0 : i32, i32
  }
  func.func @transform_8(%arg0: i32) -> (i32, i32) {
    %c0_i32 = arith.constant 0 : i32
    %c0_i32_0 = arith.constant 0 : i32
    %c0_i32_1 = arith.constant 0 : i32
    return %c0_i32, %c0_i32_0 : i32, i32
  }
  func.func @transform_9(%arg0: i32) -> (i32, i32) {
    %c0_i32 = arith.constant 0 : i32
    %c0_i32_0 = arith.constant 0 : i32
    return %arg0, %c0_i32 : i32, i32
  }
}

</mosaic_0001>

<llo_original>
// kernel: tpu_custom_call.1
$region0: #{tpu_custom_call.1}
  #allocation0 [shape = 'u32[]', space=smem, size = 0x4, offset = 0x4, fixed_abs, tag = 'smem constant byte address 0x4 - core index']
  #allocation1 [shape = 'u32[144,128]{1,0:T(1,128)}', space=vmem, size = 0x12000, scoped, tag = 'internal scratch']
  %s0 = inlined_call_operand.vmem [shape: f32[8,8,2], index: 0, kind: input, shape index: {}]
  %s1 = inlined_call_operand.vmem [shape: f32[2,32], index: 1, kind: input, shape index: {}]
  %s2 = inlined_call_operand.vmem [shape: f32[1,32], index: 2, kind: input, shape index: {}]
  %s3 = inlined_call_operand.vmem [shape: f32[32,32], index: 3, kind: input, shape index: {}]
  %s4 = inlined_call_operand.vmem [shape: f32[1,32], index: 4, kind: input, shape index: {}]
  %s5 = inlined_call_operand.vmem [shape: f32[32,32], index: 5, kind: input, shape index: {}]
  %s6 = inlined_call_operand.vmem [shape: f32[1,32], index: 6, kind: input, shape index: {}]
  %s7 = inlined_call_operand.vmem [shape: f32[32,2], index: 7, kind: input, shape index: {}]
  %s8 = inlined_call_operand.vmem [shape: f32[1,2], index: 8, kind: input, shape index: {}]
  %s9 = inlined_call_operand.vmem [shape: f32[8,2], index: 9, kind: output, shape index: {}]
  %s10 = sld [smem:[#allocation0]]
  $region46: #{tpu_custom_call.1} parent=0
    _
  %s12 = ssub.s32 1, %s10
  %s13 = scalar_select 0, %s12, %s10
  // Predicated region
  $region2: #{tpu_custom_call.1} parent=0 // pred_check
    _
  $region3: #{tpu_custom_call.1} parent=0 // pred_check_branch
    %15 = sbr.rel (0) target = $region5
  $region4: #{tpu_custom_call.1} parent=0 // pred_region
    _
  $region5: #{tpu_custom_call.1} parent=0 // pred_fallthru
    _
  // Predicated region
  $region6: #{tpu_custom_call.1} parent=0 // pred_check
    _
  $region7: #{tpu_custom_call.1} parent=0 // pred_check_branch
    %17 = sbr.rel (0) target = $region9
  $region8: #{tpu_custom_call.1} parent=0 // pred_region
    _
  $region9: #{tpu_custom_call.1} parent=0 // pred_fallthru
    _
  // Predicated region
  $region10: #{tpu_custom_call.1} parent=0 // pred_check
    _
  $region11: #{tpu_custom_call.1} parent=0 // pred_check_branch
    %19 = sbr.rel (0) target = $region13
  $region12: #{tpu_custom_call.1} parent=0 // pred_region
    _
  $region13: #{tpu_custom_call.1} parent=0 // pred_fallthru
    _
  // Predicated region
  $region14: #{tpu_custom_call.1} parent=0 // pred_check
    _
  $region15: #{tpu_custom_call.1} parent=0 // pred_check_branch
    %21 = sbr.rel (0) target = $region17
  $region16: #{tpu_custom_call.1} parent=0 // pred_region
    _
  $region17: #{tpu_custom_call.1} parent=0 // pred_fallthru
    _
  // Predicated region
  $region18: #{tpu_custom_call.1} parent=0 // pred_check
    _
  $region19: #{tpu_custom_call.1} parent=0 // pred_check_branch
    %23 = sbr.rel (0) target = $region21
  $region20: #{tpu_custom_call.1} parent=0 // pred_region
    _
  $region21: #{tpu_custom_call.1} parent=0 // pred_fallthru
    _
  // Predicated region
  $region22: #{tpu_custom_call.1} parent=0 // pred_check
    _
  $region23: #{tpu_custom_call.1} parent=0 // pred_check_branch
    %25 = sbr.rel (0) target = $region25
  $region24: #{tpu_custom_call.1} parent=0 // pred_region
    _
  $region25: #{tpu_custom_call.1} parent=0 // pred_fallthru
    _
  // Predicated region
  $region26: #{tpu_custom_call.1} parent=0 // pred_check
    _
  $region27: #{tpu_custom_call.1} parent=0 // pred_check_branch
    %27 = sbr.rel (0) target = $region29
  $region28: #{tpu_custom_call.1} parent=0 // pred_region
    _
  $region29: #{tpu_custom_call.1} parent=0 // pred_fallthru
    _
  // Predicated region
  $region30: #{tpu_custom_call.1} parent=0 // pred_check
    _
  $region31: #{tpu_custom_call.1} parent=0 // pred_check_branch
    %29 = sbr.rel (0) target = $region33
  $region32: #{tpu_custom_call.1} parent=0 // pred_region
    _
  $region33: #{tpu_custom_call.1} parent=0 // pred_fallthru
    _
  // Predicated region
  $region34: #{tpu_custom_call.1} parent=0 // pred_check
    _
  $region35: #{tpu_custom_call.1} parent=0 // pred_check_branch
    %31 = sbr.rel (0) target = $region37
  $region36: #{tpu_custom_call.1} parent=0 // pred_region
    _
  $region37: #{tpu_custom_call.1} parent=0 // pred_fallthru
    _
  %v32 = vld [vmem:[%s0] sm:$0xff]
  %v33 = vld [vmem:[%s0 + $0x8] sm:$0xff]
  %v34 = vld [vmem:[%s0 + $0x10] sm:$0xff]
  %v35 = vld [vmem:[%s0 + $0x18] sm:$0xff]
  %v36 = vld [vmem:[%s0 + $0x20] sm:$0xff]
  %v37 = vld [vmem:[%s0 + $0x28] sm:$0xff]
  %v38 = vld [vmem:[%s0 + $0x30] sm:$0xff]
  %v39 = vld [vmem:[%s0 + $0x38] sm:$0xff]
  %v40 = vld [vmem:[%s1] sm:$0x3]
  %v41 = vld [vmem:[%s2] sm:$0x1]
  %43 = vset.pattern.permute.xlu0 0
  %44 = vperm.xlu0 %43, %v32
  %v45 = vpop.permute.xlu0 %44
  %48 = vset.pattern.permute.xlu0 0
  %49 = vperm.xlu0 %48, %v33
  %v50 = vpop.permute.xlu0 %49
  %53 = vset.pattern.permute.xlu0 0
  %54 = vperm.xlu0 %53, %v34
  %v55 = vpop.permute.xlu0 %54
  %58 = vset.pattern.permute.xlu0 0
  %59 = vperm.xlu0 %58, %v35
  %v60 = vpop.permute.xlu0 %59
  %63 = vset.pattern.permute.xlu0 0
  %64 = vperm.xlu0 %63, %v36
  %v65 = vpop.permute.xlu0 %64
  %68 = vset.pattern.permute.xlu0 0
  %69 = vperm.xlu0 %68, %v37
  %v70 = vpop.permute.xlu0 %69
  %73 = vset.pattern.permute.xlu0 0
  %74 = vperm.xlu0 %73, %v38
  %v75 = vpop.permute.xlu0 %74
  %78 = vset.pattern.permute.xlu0 0
  %79 = vperm.xlu0 %78, %v39
  %v80 = vpop.permute.xlu0 %79
  %v82 = vlaneseq
  %v83 = vshrl.u32 %v82, 7
  %v84 = vsub.s32 0, %v83
  %v85 = vrot.slane %v40, %v84
  %v86 = vmul.f32 %v45, %v85
  %v87 = vmul.f32 %v50, %v85
  %v88 = vmul.f32 %v55, %v85
  %v89 = vmul.f32 %v60, %v85
  %v90 = vmul.f32 %v65, %v85
  %v91 = vmul.f32 %v70, %v85
  %v92 = vmul.f32 %v75, %v85
  %v93 = vmul.f32 %v80, %v85
  %94 = vset.pattern.permute.xlu0 1
  %95 = vperm.xlu0 %94, %v32
  %v96 = vpop.permute.xlu0 %95
  %98 = vset.pattern.permute.xlu0 1
  %99 = vperm.xlu0 %98, %v33
  %v100 = vpop.permute.xlu0 %99
  %102 = vset.pattern.permute.xlu0 1
  %103 = vperm.xlu0 %102, %v34
  %v104 = vpop.permute.xlu0 %103
  %106 = vset.pattern.permute.xlu0 1
  %107 = vperm.xlu0 %106, %v35
  %v108 = vpop.permute.xlu0 %107
  %110 = vset.pattern.permute.xlu0 1
  %111 = vperm.xlu0 %110, %v36
  %v112 = vpop.permute.xlu0 %111
  %114 = vset.pattern.permute.xlu0 1
  %115 = vperm.xlu0 %114, %v37
  %v116 = vpop.permute.xlu0 %115
  %118 = vset.pattern.permute.xlu0 1
  %119 = vperm.xlu0 %118, %v38
  %v120 = vpop.permute.xlu0 %119
  %122 = vset.pattern.permute.xlu0 1
  %123 = vperm.xlu0 %122, %v39
  %v124 = vpop.permute.xlu0 %123
  %v126 = vlaneseq
  %v127 = vshrl.u32 %v126, 7
  %v128 = vsub.s32 1, %v127
  %v129 = vrot.slane %v40, %v128
  %v130 = vmul.f32 %v96, %v129
  %v131 = vmul.f32 %v100, %v129
  %v132 = vmul.f32 %v104, %v129
  %v133 = vmul.f32 %v108, %v129
  %v134 = vmul.f32 %v112, %v129
  %v135 = vmul.f32 %v116, %v129
  %v136 = vmul.f32 %v120, %v129
  %v137 = vmul.f32 %v124, %v129
  %v138 = vadd.f32 %v86, %v130
  %v139 = vadd.f32 %v87, %v131
  %v140 = vadd.f32 %v88, %v132
  %v141 = vadd.f32 %v89, %v133
  %v142 = vadd.f32 %v90, %v134
  %v143 = vadd.f32 %v91, %v135
  %v144 = vadd.f32 %v92, %v136
  %v145 = vadd.f32 %v93, %v137
  %v147 = vlaneseq
  %v148 = vshrl.u32 %v147, 7
  %v149 = vsub.s32 0, %v148
  %v150 = vrot.slane %v41, %v149
  %v152 = vadd.f32 %v138, %v150
  %v153 = vadd.f32 %v139, %v150
  %v154 = vadd.f32 %v140, %v150
  %v155 = vadd.f32 %v141, %v150
  %v156 = vadd.f32 %v142, %v150
  %v157 = vadd.f32 %v143, %v150
  %v158 = vadd.f32 %v144, %v150
  %v159 = vadd.f32 %v145, %v150
  %v160 = vmax.f32 %v152, 0.0
  %v161 = vmax.f32 %v153, 0.0
  %v162 = vmax.f32 %v154, 0.0
  %v163 = vmax.f32 %v155, 0.0
  %v164 = vmax.f32 %v156, 0.0
  %v165 = vmax.f32 %v157, 0.0
  %v166 = vmax.f32 %v158, 0.0
  %v167 = vmax.f32 %v159, 0.0
  %vm168 = vcmask 261120
  %v169 = vsel %vm168, %v160, 0.0
  %v170 = vrot.slane %v169, 4
  %v171 = vadd.f32 %v169, %v170
  %v172 = vrot.slane %v171, 2
  %v173 = vadd.f32 %v171, %v172
  %v174 = vrot.slane %v173, 1
  %v175 = vadd.f32 %v173, %v174
  %v176 = vsel %vm168, %v161, 0.0
  %v177 = vrot.slane %v176, 4
  %v178 = vadd.f32 %v176, %v177
  %v179 = vrot.slane %v178, 2
  %v180 = vadd.f32 %v178, %v179
  %v181 = vrot.slane %v180, 1
  %v182 = vadd.f32 %v180, %v181
  %v183 = vsel %vm168, %v162, 0.0
  %v184 = vrot.slane %v183, 4
  %v185 = vadd.f32 %v183, %v184
  %v186 = vrot.slane %v185, 2
  %v187 = vadd.f32 %v185, %v186
  %v188 = vrot.slane %v187, 1
  %v189 = vadd.f32 %v187, %v188
  %v190 = vsel %vm168, %v163, 0.0
  %v191 = vrot.slane %v190, 4
  %v192 = vadd.f32 %v190, %v191
  %v193 = vrot.slane %v192, 2
  %v194 = vadd.f32 %v192, %v193
  %v195 = vrot.slane %v194, 1
  %v196 = vadd.f32 %v194, %v195
  %v197 = vsel %vm168, %v164, 0.0
  %v198 = vrot.slane %v197, 4
  %v199 = vadd.f32 %v197, %v198
  %v200 = vrot.slane %v199, 2
  %v201 = vadd.f32 %v199, %v200
  %v202 = vrot.slane %v201, 1
  %v203 = vadd.f32 %v201, %v202
  %v204 = vsel %vm168, %v165, 0.0
  %v205 = vrot.slane %v204, 4
  %v206 = vadd.f32 %v204, %v205
  %v207 = vrot.slane %v206, 2
  %v208 = vadd.f32 %v206, %v207
  %v209 = vrot.slane %v208, 1
  %v210 = vadd.f32 %v208, %v209
  %v211 = vsel %vm168, %v166, 0.0
  %v212 = vrot.slane %v211, 4
  %v213 = vadd.f32 %v211, %v212
  %v214 = vrot.slane %v213, 2
  %v215 = vadd.f32 %v213, %v214
  %v216 = vrot.slane %v215, 1
  %v217 = vadd.f32 %v215, %v216
  %v218 = vsel %vm168, %v167, 0.0
  %v219 = vrot.slane %v218, 4
  %v220 = vadd.f32 %v218, %v219
  %v221 = vrot.slane %v220, 2
  %v222 = vadd.f32 %v220, %v221
  %v223 = vrot.slane %v222, 1
  %v224 = vadd.f32 %v222, %v223
  %v225 = vmul.f32 %v175, 0.125
  %v226 = vmul.f32 %v182, 0.125
  %v227 = vmul.f32 %v189, 0.125
  %v228 = vmul.f32 %v196, 0.125
  %v229 = vmul.f32 %v203, 0.125
  %v230 = vmul.f32 %v210, 0.125
  %v231 = vmul.f32 %v217, 0.125
  %v232 = vmul.f32 %v224, 0.125
  %v233 = vld [vmem:[%s3] sm:$0xff]
  %v234 = vld [vmem:[%s3 + $0x8] sm:$0xff]
  %v235 = vld [vmem:[%s3 + $0x10] sm:$0xff]
  %v236 = vld [vmem:[%s3 + $0x18] sm:$0xff]
  %v237 = vld [vmem:[%s4] sm:$0x1]
  %v239 = vlaneseq
  %v240 = vshrl.u32 %v239, 7
  %v241 = vsub.s32 0, %v240
  %v242 = vrot.slane %v237, %v241
  %vm252 = vcmask 1041409
  %v253 = vsel %vm252, %v226, %v225
  %vm254 = vcmask 1042434
  %v255 = vsel %vm254, %v227, %v253
  %vm256 = vcmask 1043459
  %v257 = vsel %vm256, %v228, %v255
  %vm258 = vcmask 1044484
  %v259 = vsel %vm258, %v229, %v257
  %vm260 = vcmask 1045509
  %v261 = vsel %vm260, %v230, %v259
  %vm262 = vcmask 1046534
  %v263 = vsel %vm262, %v231, %v261
  %vm264 = vcmask 1047559
  %v265 = vsel %vm264, %v232, %v263
  %v266 = vsel %vm168, %v265, 0
  %268 = vmatprep.subr.mxu0 0.0
  %269 = vmatpush1.msra.mxu0 %v233
  %270 = vmatprep.subr.mxu0 0.0
  %271 = vmatpush1.msra.mxu0 %v234
  %272 = vmatprep.subr.mxu0 0.0
  %273 = vmatpush1.msra.mxu0 %v235
  %274 = vmatprep.subr.mxu0 0.0
  %275 = vmatpush1.msra.mxu0 %v236
  %276 = vmatprep.subr.mxu0 0.0
  %277 = vmatpush1.msra.mxu0 0.0
  %278 = vmatprep.subr.mxu0 0.0
  %279 = vmatpush1.msra.mxu0 0.0
  %280 = vmatprep.subr.mxu0 0.0
  %281 = vmatpush1.msra.mxu0 0.0
  %282 = vmatprep.subr.mxu0 0.0
  %283 = vmatpush1.msra.mxu0 0.0
  %284 = vmatprep.subr.mxu0 0.0
  %285 = vmatpush1.msra.mxu0 0.0
  %286 = vmatprep.subr.mxu0 0.0
  %287 = vmatpush1.msra.mxu0 0.0
  %288 = vmatprep.subr.mxu0 0.0
  %289 = vmatpush1.msra.mxu0 0.0
  %290 = vmatprep.subr.mxu0 0.0
  %291 = vmatpush1.msra.mxu0 0.0
  %292 = vmatprep.subr.mxu0 0.0
  %293 = vmatpush1.msra.mxu0 0.0
  %294 = vmatprep.subr.mxu0 0.0
  %295 = vmatpush1.msra.mxu0 0.0
  %296 = vmatprep.subr.mxu0 0.0
  %297 = vmatpush1.msra.mxu0 0.0
  %298 = vmatprep.subr.mxu0 0.0
  %299 = vmatpush1.msra.mxu0 0.0
  %300 = vmatprep.subr.mxu0 0.0
  %301 = vmatpush1.msra.mxu0 0.0
  %302 = vmatprep.subr.mxu0 0.0
  %303 = vmatpush1.msra.mxu0 0.0
  %304 = vmatprep.subr.mxu0 0.0
  %305 = vmatpush1.msra.mxu0 0.0
  %306 = vmatprep.subr.mxu0 0.0
  %307 = vmatpush1.msra.mxu0 0.0
  %308 = vmatprep.subr.mxu0 0.0
  %309 = vmatpush1.msra.mxu0 0.0
  %310 = vmatprep.subr.mxu0 0.0
  %311 = vmatpush1.msra.mxu0 0.0
  %312 = vmatprep.subr.mxu0 0.0
  %313 = vmatpush1.msra.mxu0 0.0
  %314 = vmatprep.subr.mxu0 0.0
  %315 = vmatpush1.msra.mxu0 0.0
  %316 = vmatprep.subr.mxu0 0.0
  %317 = vmatpush1.msra.mxu0 0.0
  %318 = vmatprep.subr.mxu0 0.0
  %319 = vmatpush1.msra.mxu0 0.0
  %320 = vmatprep.subr.mxu0 0.0
  %321 = vmatpush1.msra.mxu0 0.0
  %322 = vmatprep.subr.mxu0 0.0
  %323 = vmatpush1.msra.mxu0 0.0
  %324 = vmatprep.subr.mxu0 0.0
  %325 = vmatpush1.msra.mxu0 0.0
  %326 = vmatprep.subr.mxu0 0.0
  %327 = vmatpush1.msra.mxu0 0.0
  %328 = vmatprep.subr.mxu0 0.0
  %329 = vmatpush1.msra.mxu0 0.0
  %330 = vmatprep.subr.mxu0 0.0
  %331 = vmatpush1.msra.mxu0 0.0
  %332 = vmatprep.mubr.f32.mxu0 0.0
  %333 = vmatmul.mubr.f32.gmra.mrb[0].mxu0 %v266
  %v334 = vpop.f32.mrb[0].mxu0
  %v335 = vadd.f32 %v242, %v334
  %v336 = vpop.f32.mrb[0].mxu0
  %337 = vdwg.mxu0
  %v338 = vld [vmem:[%s5] sm:$0xff]
  %v339 = vld [vmem:[%s5 + $0x8] sm:$0xff]
  %v340 = vld [vmem:[%s5 + $0x10] sm:$0xff]
  %v341 = vld [vmem:[%s5 + $0x18] sm:$0xff]
  %v342 = vld [vmem:[%s6] sm:$0x1]
  %v344 = vlaneseq
  %v345 = vshrl.u32 %v344, 7
  %v346 = vsub.s32 0, %v345
  %v347 = vrot.slane %v342, %v346
  %v350 = vsel %vm168, %v335, 0
  %352 = vmatprep.subr.mxu0 0.0
  %353 = vmatpush1.msra.mxu0 %v338
  %354 = vmatprep.subr.mxu0 0.0
  %355 = vmatpush1.msra.mxu0 %v339
  %356 = vmatprep.subr.mxu0 0.0
  %357 = vmatpush1.msra.mxu0 %v340
  %358 = vmatprep.subr.mxu0 0.0
  %359 = vmatpush1.msra.mxu0 %v341
  %360 = vmatprep.subr.mxu0 0.0
  %361 = vmatpush1.msra.mxu0 0.0
  %362 = vmatprep.subr.mxu0 0.0
  %363 = vmatpush1.msra.mxu0 0.0
  %364 = vmatprep.subr.mxu0 0.0
  %365 = vmatpush1.msra.mxu0 0.0
  %366 = vmatprep.subr.mxu0 0.0
  %367 = vmatpush1.msra.mxu0 0.0
  %368 = vmatprep.subr.mxu0 0.0
  %369 = vmatpush1.msra.mxu0 0.0
  %370 = vmatprep.subr.mxu0 0.0
  %371 = vmatpush1.msra.mxu0 0.0
  %372 = vmatprep.subr.mxu0 0.0
  %373 = vmatpush1.msra.mxu0 0.0
  %374 = vmatprep.subr.mxu0 0.0
  %375 = vmatpush1.msra.mxu0 0.0
  %376 = vmatprep.subr.mxu0 0.0
  %377 = vmatpush1.msra.mxu0 0.0
  %378 = vmatprep.subr.mxu0 0.0
  %379 = vmatpush1.msra.mxu0 0.0
  %380 = vmatprep.subr.mxu0 0.0
  %381 = vmatpush1.msra.mxu0 0.0
  %382 = vmatprep.subr.mxu0 0.0
  %383 = vmatpush1.msra.mxu0 0.0
  %384 = vmatprep.subr.mxu0 0.0
  %385 = vmatpush1.msra.mxu0 0.0
  %386 = vmatprep.subr.mxu0 0.0
  %387 = vmatpush1.msra.mxu0 0.0
  %388 = vmatprep.subr.mxu0 0.0
  %389 = vmatpush1.msra.mxu0 0.0
  %390 = vmatprep.subr.mxu0 0.0
  %391 = vmatpush1.msra.mxu0 0.0
  %392 = vmatprep.subr.mxu0 0.0
  %393 = vmatpush1.msra.mxu0 0.0
  %394 = vmatprep.subr.mxu0 0.0
  %395 = vmatpush1.msra.mxu0 0.0
  %396 = vmatprep.subr.mxu0 0.0
  %397 = vmatpush1.msra.mxu0 0.0
  %398 = vmatprep.subr.mxu0 0.0
  %399 = vmatpush1.msra.mxu0 0.0
  %400 = vmatprep.subr.mxu0 0.0
  %401 = vmatpush1.msra.mxu0 0.0
  %402 = vmatprep.subr.mxu0 0.0
  %403 = vmatpush1.msra.mxu0 0.0
  %404 = vmatprep.subr.mxu0 0.0
  %405 = vmatpush1.msra.mxu0 0.0
  %406 = vmatprep.subr.mxu0 0.0
  %407 = vmatpush1.msra.mxu0 0.0
  %408 = vmatprep.subr.mxu0 0.0
  %409 = vmatpush1.msra.mxu0 0.0
  %410 = vmatprep.subr.mxu0 0.0
  %411 = vmatpush1.msra.mxu0 0.0
  %412 = vmatprep.subr.mxu0 0.0
  %413 = vmatpush1.msra.mxu0 0.0
  %414 = vmatprep.subr.mxu0 0.0
  %415 = vmatpush1.msra.mxu0 0.0
  %416 = vmatprep.mubr.f32.mxu0 0.0
  %417 = vmatmul.mubr.f32.gmra.mrb[0].mxu0 %v350
  %v418 = vpop.f32.mrb[0].mxu0
  %v419 = vadd.f32 %v347, %v418
  %v420 = vpop.f32.mrb[0].mxu0
  %421 = vdwg.mxu0
  %v422 = vmax.f32 %v419, 0.0
  %v423 = vld [vmem:[%s7] sm:$0xff]
  %v424 = vld [vmem:[%s7 + $0x8] sm:$0xff]
  %v425 = vld [vmem:[%s7 + $0x10] sm:$0xff]
  %v426 = vld [vmem:[%s7 + $0x18] sm:$0xff]
  %v427 = vld [vmem:[%s8] sm:$0x1]
  %v429 = vlaneseq
  %v430 = vshrl.u32 %v429, 7
  %v431 = vsub.s32 0, %v430
  %v432 = vrot.slane %v427, %v431
  %v435 = vsel %vm168, %v422, 0
  %437 = vmatprep.subr.mxu0 0.0
  %438 = vmatpush1.msra.mxu0 %v423
  %439 = vmatprep.subr.mxu0 0.0
  %440 = vmatpush1.msra.mxu0 %v424
  %441 = vmatprep.subr.mxu0 0.0
  %442 = vmatpush1.msra.mxu0 %v425
  %443 = vmatprep.subr.mxu0 0.0
  %444 = vmatpush1.msra.mxu0 %v426
  %445 = vmatprep.subr.mxu0 0.0
  %446 = vmatpush1.msra.mxu0 0.0
  %447 = vmatprep.subr.mxu0 0.0
  %448 = vmatpush1.msra.mxu0 0.0
  %449 = vmatprep.subr.mxu0 0.0
  %450 = vmatpush1.msra.mxu0 0.0
  %451 = vmatprep.subr.mxu0 0.0
  %452 = vmatpush1.msra.mxu0 0.0
  %453 = vmatprep.subr.mxu0 0.0
  %454 = vmatpush1.msra.mxu0 0.0
  %455 = vmatprep.subr.mxu0 0.0
  %456 = vmatpush1.msra.mxu0 0.0
  %457 = vmatprep.subr.mxu0 0.0
  %458 = vmatpush1.msra.mxu0 0.0
  %459 = vmatprep.subr.mxu0 0.0
  %460 = vmatpush1.msra.mxu0 0.0
  %461 = vmatprep.subr.mxu0 0.0
  %462 = vmatpush1.msra.mxu0 0.0
  %463 = vmatprep.subr.mxu0 0.0
  %464 = vmatpush1.msra.mxu0 0.0
  %465 = vmatprep.subr.mxu0 0.0
  %466 = vmatpush1.msra.mxu0 0.0
  %467 = vmatprep.subr.mxu0 0.0
  %468 = vmatpush1.msra.mxu0 0.0
  %469 = vmatprep.subr.mxu0 0.0
  %470 = vmatpush1.msra.mxu0 0.0
  %471 = vmatprep.subr.mxu0 0.0
  %472 = vmatpush1.msra.mxu0 0.0
  %473 = vmatprep.subr.mxu0 0.0
  %474 = vmatpush1.msra.mxu0 0.0
  %475 = vmatprep.subr.mxu0 0.0
  %476 = vmatpush1.msra.mxu0 0.0
  %477 = vmatprep.subr.mxu0 0.0
  %478 = vmatpush1.msra.mxu0 0.0
  %479 = vmatprep.subr.mxu0 0.0
  %480 = vmatpush1.msra.mxu0 0.0
  %481 = vmatprep.subr.mxu0 0.0
  %482 = vmatpush1.msra.mxu0 0.0
  %483 = vmatprep.subr.mxu0 0.0
  %484 = vmatpush1.msra.mxu0 0.0
  %485 = vmatprep.subr.mxu0 0.0
  %486 = vmatpush1.msra.mxu0 0.0
  %487 = vmatprep.subr.mxu0 0.0
  %488 = vmatpush1.msra.mxu0 0.0
  %489 = vmatprep.subr.mxu0 0.0
  %490 = vmatpush1.msra.mxu0 0.0
  %491 = vmatprep.subr.mxu0 0.0
  %492 = vmatpush1.msra.mxu0 0.0
  %493 = vmatprep.subr.mxu0 0.0
  %494 = vmatpush1.msra.mxu0 0.0
  %495 = vmatprep.subr.mxu0 0.0
  %496 = vmatpush1.msra.mxu0 0.0
  %497 = vmatprep.subr.mxu0 0.0
  %498 = vmatpush1.msra.mxu0 0.0
  %499 = vmatprep.subr.mxu0 0.0
  %500 = vmatpush1.msra.mxu0 0.0
  %501 = vmatprep.mubr.f32.mxu0 0.0
  %502 = vmatmul.mubr.f32.gmra.mrb[0].mxu0 %v435
  %v503 = vpop.f32.mrb[0].mxu0
  %v504 = vadd.f32 %v432, %v503
  %v505 = vpop.f32.mrb[0].mxu0
  %506 = vdwg.mxu0
  %v507 = vtanh.pop %v504
  %v508 = vmul.f32 %v507, 2.0
  %vm509 = vcmask 15360
  %510 = vst.msk [vmem:[%s9] sm:$0xff] %vm509, %v508
  // Predicated region
  $region38: #{tpu_custom_call.1} parent=0 // pred_check
    _
  $region39: #{tpu_custom_call.1} parent=0 // pred_check_branch
    %512 = sbr.rel (0) target = $region41
  $region40: #{tpu_custom_call.1} parent=0 // pred_region
    _
  $region41: #{tpu_custom_call.1} parent=0 // pred_fallthru
    _
  // Predicated region
  $region42: #{tpu_custom_call.1} parent=0 // pred_check
    _
  $region43: #{tpu_custom_call.1} parent=0 // pred_check_branch
    %514 = sbr.rel (0) target = $region45
  $region44: #{tpu_custom_call.1} parent=0 // pred_region
    _
  $region45: #{tpu_custom_call.1} parent=0 // pred_fallthru
    _

</llo_original>
